<compile_context>
chip_gen: v5e
topology: v5e:2x2
jax: 0.10.0
libtpu: 0.0.40
codegen_flags: <defaults>
</compile_context>

<pallas_src>
import jax
import jax.numpy as jnp
from jax import lax
from jax.experimental import pallas as pl
from jax.experimental.pallas import tpu as pltpu

# logical module shapes
IN_F = 2     # Linear in_features
OUT_F = 3    # Linear out_features


def _linear_relu_sub1_kernel(x_ref, p_ref, o_ref):
    # x_ref: (B, IN_F)        f32  SMEM  (scalar reads; 2-D SMEM pad here is
    #                                     only 8x128 words = 4 KiB, harmless)
    # p_ref: (IN_F+1, OUT_F)  f32  VMEM  (rows 0..IN_F-1 = W^T, row IN_F = bias)
    # o_ref: (B, OUT_F)       f32  VMEM  (block == array dims; masked store)
    B, N = o_ref.shape
    bias = p_ref[IN_F:IN_F + 1, :]                             # (1, N) bias row
    y = jnp.broadcast_to(bias, (B, N))
    row_id = lax.broadcasted_iota(jnp.int32, (B, N), 0)
    for i in range(B):                                         # static unroll, B tiny
        acc = bias
        for k in range(IN_F):                                  # static unroll, K = 2
            # SMEM scalar read -> splat -> VPU FMA against a parameter row.
            acc = acc + x_ref[i, k] * p_ref[k:k + 1, :]
        y = jnp.where(row_id == i, jnp.broadcast_to(acc, (B, N)), y)
    o_ref[...] = jnp.maximum(y, 0.0) - 1.0                     # ReLU then -1


def pack_params(weight, bias):
    """Fuse call-invariant Linear params once: rows 0..IN_F-1 = W^T, row IN_F = bias."""
    return jnp.concatenate([weight.T, bias[None, :]], axis=0).astype(jnp.float32)


@jax.jit
def linear_relu_sub1(x, params):
    """x: (B, 2) f32 (B small, static); params from pack_params -> (B, 3) f32."""
    B, in_f = x.shape
    assert in_f == IN_F and B >= 1, f"expected (B, {IN_F}) input, got {x.shape}"
    return pl.pallas_call(
        _linear_relu_sub1_kernel,
        out_shape=jax.ShapeDtypeStruct((B, OUT_F), jnp.float32),
        in_specs=[
            # x: whole array straight into SMEM (no vector-input DMA / double buffer)
            pl.BlockSpec(memory_space=pltpu.MemorySpace.SMEM),
            # fused W^T + bias: whole (IN_F+1, OUT_F) array in VMEM (one DMA)
            pl.BlockSpec(memory_space=pltpu.MemorySpace.VMEM),
        ],
        # logical-shape output: one masked vst on a single vreg; no post-call slice
        out_specs=pl.BlockSpec(memory_space=pltpu.MemorySpace.VMEM),
    )(x, params)


if __name__ == "__main__":
    key = jax.random.PRNGKey(0)
    kx, kw, kb = jax.random.split(key, 3)

    # module shapes: Linear(2, 3); input x = (1, 2) as in the PyTorch script
    B = 1
    x = jax.random.uniform(kx, (B, IN_F), dtype=jnp.float32)

    # deterministic PyTorch-style init: U(-1/sqrt(in), 1/sqrt(in))
    bound = 1.0 / jnp.sqrt(jnp.float32(IN_F))
    weight = jax.random.uniform(kw, (OUT_F, IN_F), minval=-bound, maxval=bound,
                                dtype=jnp.float32)
    bias = jax.random.uniform(kb, (OUT_F,), minval=-bound, maxval=bound,
                              dtype=jnp.float32)

    # fuse/pack the call-invariant parameters once (hoisted off the per-call path)
    params = pack_params(weight, bias)

    out = linear_relu_sub1(x, params)
    jax.block_until_ready(out)

    # pure-JAX reference check
    ref = jnp.maximum(x @ weight.T + bias, 0.0) - 1.0
    assert out.shape == (B, OUT_F)
    assert jnp.allclose(out, ref, atol=1e-6), (out, ref)

    print("KERNEL_OK")
</pallas_src>

<mosaic_0001>
module attributes {stable_mosaic.version = 11 : i64} {
  func.func @_linear_relu_sub1_kernel(%arg0: memref<1x2xf32, #tpu.memory_space<smem>>, %arg1: memref<3x3xf32, #tpu.memory_space<vmem>>, %arg2: memref<1x3xf32, #tpu.memory_space<vmem>>) attributes {dimension_semantics = [], scalar_prefetch = 0 : i64, scratch_operands = 0 : i64, tpu.core_type = #tpu.core_type<tc>} {
    %c2 = arith.constant 2 : index
    %c0 = arith.constant 0 : index
    %0 = vector.load %arg1[%c2, %c0] : memref<3x3xf32, #tpu.memory_space<vmem>>, vector<1x3xf32>
    %1 = tpu.iota {dimensions = array<i32: 0>} : vector<1x3xi32>
    %c0_0 = arith.constant 0 : index
    %c0_1 = arith.constant 0 : index
    %2 = memref.load %arg0[%c0_0, %c0_1] : memref<1x2xf32, #tpu.memory_space<smem>>
    %c0_2 = arith.constant 0 : index
    %c0_3 = arith.constant 0 : index
    %3 = vector.load %arg1[%c0_2, %c0_3] : memref<3x3xf32, #tpu.memory_space<vmem>>, vector<1x3xf32>
    %4 = vector.broadcast %2 : f32 to vector<1x3xf32>
    %5 = arith.mulf %4, %3 : vector<1x3xf32>
    %6 = arith.addf %0, %5 : vector<1x3xf32>
    %c0_4 = arith.constant 0 : index
    %c1 = arith.constant 1 : index
    %7 = memref.load %arg0[%c0_4, %c1] : memref<1x2xf32, #tpu.memory_space<smem>>
    %c1_5 = arith.constant 1 : index
    %c0_6 = arith.constant 0 : index
    %8 = vector.load %arg1[%c1_5, %c0_6] : memref<3x3xf32, #tpu.memory_space<vmem>>, vector<1x3xf32>
    %9 = vector.broadcast %7 : f32 to vector<1x3xf32>
    %10 = arith.mulf %9, %8 : vector<1x3xf32>
    %11 = arith.addf %6, %10 : vector<1x3xf32>
    %c0_i32 = arith.constant 0 : i32
    %12 = vector.broadcast %c0_i32 : i32 to vector<1x3xi32>
    %13 = arith.cmpi eq, %1, %12 : vector<1x3xi32>
    %14 = arith.select %13, %11, %0 : vector<1x3xi1>, vector<1x3xf32>
    %cst = arith.constant 0.000000e+00 : f32
    %15 = vector.broadcast %cst : f32 to vector<1x3xf32>
    %16 = arith.maximumf %14, %15 : vector<1x3xf32>
    %cst_7 = arith.constant 1.000000e+00 : f32
    %17 = vector.broadcast %cst_7 : f32 to vector<1x3xf32>
    %18 = arith.subf %16, %17 : vector<1x3xf32>
    %c0_8 = arith.constant 0 : index
    %c0_9 = arith.constant 0 : index
    %19 = vector.load %arg2[%c0_8, %c0_9] : memref<1x3xf32, #tpu.memory_space<vmem>>, vector<1x3xf32>
    tpu.vector_store %arg2[%c0_8, %c0_9], %18 {strides = array<i32>} : memref<1x3xf32, #tpu.memory_space<vmem>>, vector<1x3xf32>,
    return
  }
}

</mosaic_0001>

<llo_original>
// kernel: linear_relu_sub1.1
$region0: #{linear_relu_sub1.1}
  #allocation0 [shape = 'u32[]', space=smem, size = 0x4, offset = 0x4, fixed_abs, tag = 'smem constant byte address 0x4 - core index']
  #allocation1 [shape = 'u32[72,128]{1,0:T(1,128)}', space=vmem, size = 0x9000, scoped, tag = 'internal scratch']
  %s0 = inlined_call_operand.hbm [shape: f32[1,2], index: 0, kind: input, shape index: {}]
  %s1 = inlined_call_operand.hbm [shape: f32[3,3], index: 1, kind: input, shape index: {}]
  %s2 = inlined_call_operand.hbm [shape: f32[1,3], index: 2, kind: output, shape index: {}]
  %s3 = sld [smem:[#allocation0]]
  $region26: #{linear_relu_sub1.1} parent=0
    _
  %s5 = ssub.s32 1, %s3
  %s6 = scalar_select 0, %s5, %s3
  $region1: #{linear_relu_sub1.1} parent=0
    #allocation2 [shape = 'u8[512]{0}', space=smem, size = 0x200, scoped, tag = 'input window, operand 0, single buffered']
    #allocation3 [shape = 's32[1]{0}', space=sflag, size = 0x4, scoped, tag = 'scoped memory for linear_relu_sub1.1']
    #allocation4 [shape = 's32[1]{0}', space=sflag, size = 0x4, scoped, tag = 'scoped memory for linear_relu_sub1.1']
    #allocation5 [shape = 's32[1]{0}', space=sflag, size = 0x4, scoped, tag = 'scoped memory for linear_relu_sub1.1']
    #allocation6 [shape = 'u8[2048]{0}', space=vmem, size = 0x800, scoped, tag = 'input window, operand 1, single buffered']
    #allocation7 [shape = 'u8[512]{0}', space=vmem, size = 0x400, scoped, tag = 'output window, operand 0, single buffered']
    %7 = vsyncpa [#allocation5], 0
    %8 = vsyncpa [#allocation3], 0
    %9 = vsyncpa [#allocation4], 0
    // Predicated region
    $region2: #{linear_relu_sub1.1} parent=1 // pred_check
      _
    $region3: #{linear_relu_sub1.1} parent=1 // pred_check_branch
      %11 = sbr.rel (0) target = $region5
    $region4: #{linear_relu_sub1.1} parent=1 // pred_region
      %13 = vsyncadd [#allocation5], 0
      %s15 = sshll.u32 %s0, 4
      %s16 = int_to_ptr.hbm [resolvable:$true] %s15
      %18 = dma.hbm_to_smem %s16, 16, [#allocation2], [#allocation5]
    $region5: #{linear_relu_sub1.1} parent=1 // pred_fallthru
      _
    // Predicated region
    $region6: #{linear_relu_sub1.1} parent=1 // pred_check
      _
    $region7: #{linear_relu_sub1.1} parent=1 // pred_check_branch
      %20 = sbr.rel (0) target = $region9
    $region8: #{linear_relu_sub1.1} parent=1 // pred_region
      %22 = vsyncadd [#allocation3], 0
      %s24 = sshll.u32 %s1, 4
      %s25 = int_to_ptr.hbm [resolvable:$true] %s24
      %s26 = sshll.u32 [#allocation6], 4
      %s27 = int_to_ptr.vmem [resolvable:$true] %s26
      %29 = dma.hbm_to_vmem [thread:$0]  %s25, 64, %s27, [#allocation3]
    $region9: #{linear_relu_sub1.1} parent=1 // pred_fallthru
      _
    // Predicated region
    $region10: #{linear_relu_sub1.1} parent=1 // pred_check
      _
    $region11: #{linear_relu_sub1.1} parent=1 // pred_check_branch
      %31 = sbr.rel (0) target = $region13
    $region12: #{linear_relu_sub1.1} parent=1 // pred_region
      %33 = dma.done [#allocation5], 16
    $region13: #{linear_relu_sub1.1} parent=1 // pred_fallthru
      _
    // Predicated region
    $region14: #{linear_relu_sub1.1} parent=1 // pred_check
      _
    $region15: #{linear_relu_sub1.1} parent=1 // pred_check_branch
      %35 = sbr.rel (0) target = $region17
    $region16: #{linear_relu_sub1.1} parent=1 // pred_region
      %37 = dma.done [#allocation3], 64
    $region17: #{linear_relu_sub1.1} parent=1 // pred_fallthru
      _
    %38 = sfence
    %v39 = vld [vmem:[#allocation6 + $0x2] sm:$0x1]
    %v40 = vlaneseq
    %v41 = vshrl.u32 %v40, 7
    %s42 = sld [smem:[#allocation2]]
    %v43 = vld [vmem:[#allocation6] sm:$0x1]
    %v44 = vstv %s42
    %v45 = vmul.f32 %v44, %v43
    %v46 = vadd.f32 %v39, %v45
    %s47 = sld [smem:[#allocation2 + $0x1]]
    %v48 = vld [vmem:[#allocation6 + $0x1] sm:$0x1]
    %v49 = vstv %s47
    %v50 = vmul.f32 %v49, %v48
    %v51 = vadd.f32 %v46, %v50
    %vm52 = vcmp.eq.s32.totalorder %v41, 0
    %v53 = vsel %vm52, %v51, %v39
    %v54 = vmax.f32 %v53, 0.0
    %v55 = vsub.f32 %v54, 1.0
    %vm56 = vcmask 16384
    %57 = vst.msk [vmem:[#allocation7] sm:$0x1] %vm56, %v55
    // Predicated region
    $region18: #{linear_relu_sub1.1} parent=1 // pred_check
      _
    $region19: #{linear_relu_sub1.1} parent=1 // pred_check_branch
      %59 = sbr.rel (0) target = $region21
    $region20: #{linear_relu_sub1.1} parent=1 // pred_region
      %61 = vsyncadd [#allocation4], 0
      %s63 = sshll.u32 [#allocation7], 4
      %s64 = int_to_ptr.vmem [resolvable:$true] %s63
      %s65 = sshll.u32 %s2, 4
      %s66 = int_to_ptr.hbm [resolvable:$true] %s65
      %68 = dma.vmem_to_hbm [thread:$0]  %s64, 16, %s66, [#allocation4]
    $region21: #{linear_relu_sub1.1} parent=1 // pred_fallthru
      _
    // Predicated region
    $region22: #{linear_relu_sub1.1} parent=1 // pred_check
      _
    $region23: #{linear_relu_sub1.1} parent=1 // pred_check_branch
      %70 = sbr.rel (0) target = $region25
    $region24: #{linear_relu_sub1.1} parent=1 // pred_region
      %72 = dma.done [#allocation4], 16
    $region25: #{linear_relu_sub1.1} parent=1 // pred_fallthru
      _
    %73 = vsyncpa [#allocation3], 1
    %74 = vsyncpa [#allocation4], 1
    %75 = vsyncpa [#allocation5], 1

</llo_original>
